<compile_context>
chip_gen: v7x
topology: tpu7x:2x2x1
jax: 0.10.0
libtpu: 0.0.40
codegen_flags: <defaults>
</compile_context>

<pallas_src>
import jax
import jax.numpy as jnp
from jax import lax
from jax.experimental import pallas as pl
from jax.experimental.pallas import tpu as pltpu

S_SIZE = 1659   # s_size (module default)
H_SIZE = 5      # h_size
A_SIZE = 8      # a_size
H_PAD = 8       # sublane-aligned hidden; row H_SIZE carries the constant 1 (folds b2)
LANE = 128      # lane-dense width for logits / output slab
NEG = -1e30     # "minus infinity" for padded logit lanes (finite -> no inf/nan)


def _policy_kernel(x_ref, g_ref, w1_ref, b1_ref, w2_ref, out_ref):
    # ---- layer 1: h = relu(x @ W1^T + b1) as VPU multiply + lane reduction.
    # x_ref : (1, S_SIZE) f32; w1_ref: (H_PAD, S_SIZE) bf16; b1_ref: (H_PAD, 1) f32.
    w1 = w1_ref[...].astype(jnp.float32)                    # bf16 -> f32 widen (v5e-safe)
    h = jnp.sum(x_ref[...] * w1, axis=-1, keepdims=True) + b1_ref[...]   # (H_PAD, 1)
    h = jnp.maximum(h, 0.0)                                  # h[H_SIZE] == 1.0 -> adds b2

    # ---- layer 2 at full 128-lane width: real logits in lanes 0..A-1,
    # padded lanes get -1e30 from the packed bias row (so softmax ignores them).
    logits = jnp.sum(h * w2_ref[...], axis=0, keepdims=True)             # (1, LANE)

    # ---- stable softmax / log-softmax (== torch.softmax(dim=0) for 1-D input).
    m = jnp.max(logits, axis=-1, keepdims=True)
    shifted = logits - m
    denom = jnp.sum(jnp.exp(shifted), axis=-1, keepdims=True)
    logp = shifted - jnp.log(denom)                                       # (1, LANE)
    probs = jnp.exp(logp)                                                 # exactly exp(logp)

    # ---- categorical sample via Gumbel-max (== np.random.choice(p=probs)),
    # tie-safe: pick the largest tied lane index (always in [0, A)).
    scores = logp + g_ref[...]
    best = jnp.max(scores, axis=-1, keepdims=True)
    lane = lax.broadcasted_iota(jnp.int32, (1, LANE), 1)
    act_i = jnp.max(jnp.where(scores >= best, lane, -1), axis=-1, keepdims=True)
    lpa = jnp.sum(jnp.where(lane == act_i, logp, 0.0), axis=-1, keepdims=True)

    # ---- single fused lane-dense output slab.
    out_ref[0:1, :] = probs
    out_ref[1:2, :] = logp
    out_ref[2:3, :] = jnp.broadcast_to(act_i.astype(jnp.float32), (1, LANE))
    out_ref[3:4, :] = jnp.broadcast_to(lpa, (1, LANE))


def pack_params(input_w, input_b, hidden_w, hidden_b):
    """Pack PyTorch-layout params into the kernel layout (done once, reused)."""
    # W1 lane-dense & transposed, bf16 (halves the dominant DMA).
    w1p = jnp.zeros((H_PAD, S_SIZE), jnp.bfloat16)
    w1p = w1p.at[:H_SIZE, :].set(input_w.astype(jnp.bfloat16))
    # b1 as a tiny column; row H_SIZE carries the constant 1 that feeds b2.
    b1p = jnp.zeros((H_PAD, 1), jnp.float32)
    b1p = b1p.at[:H_SIZE, 0].set(input_b.astype(jnp.float32))
    b1p = b1p.at[H_SIZE, 0].set(1.0)
    # W2 padded to 128 lanes: real weights in lanes 0..A-1, bias in row H_SIZE,
    # and -1e30 in padded lanes of the bias row so padded logits never win.
    w2p = jnp.zeros((H_PAD, LANE), jnp.float32)
    w2p = w2p.at[:H_SIZE, :A_SIZE].set(hidden_w.astype(jnp.float32).T)
    w2p = w2p.at[H_SIZE, :A_SIZE].set(hidden_b.astype(jnp.float32))
    w2p = w2p.at[H_SIZE, A_SIZE:].set(NEG)
    return w1p, b1p, w2p


@jax.jit
def policy_forward(x, w1p, b1p, w2p, key):
    """Single fused policy step.

    Returns (probs (A,), log_probs (A,), action (int32 scalar), log_probs[action]).
    """
    g = jax.random.gumbel(key, (1, LANE), jnp.float32)
    vmem = pl.BlockSpec(memory_space=pltpu.MemorySpace.VMEM)
    slab = pl.pallas_call(
        _policy_kernel,
        out_shape=jax.ShapeDtypeStruct((4, LANE), jnp.float32),
        in_specs=[vmem, vmem, vmem, vmem, vmem],
        out_specs=vmem,
    )(x.reshape(1, S_SIZE).astype(jnp.float32), g, w1p, b1p, w2p)
    probs = slab[0, :A_SIZE]
    logp = slab[1, :A_SIZE]
    act = slab[2, 0].astype(jnp.int32)
    lpa = slab[3, 0]
    return probs, logp, act, lpa


def simple_policy(x, packed_params, key):
    """Full SimplePolicy.forward equivalent: returns (action, log_prob[action])."""
    w1p, b1p, w2p = packed_params
    _, _, act, logp_act = policy_forward(x, w1p, b1p, w2p, key)
    return act, logp_act


def init_torch_like_params(key, s_size=S_SIZE, h_size=H_SIZE, a_size=A_SIZE):
    """Deterministic init mirroring nn.Linear's U(-1/sqrt(fan_in), 1/sqrt(fan_in))."""
    k1, k2, k3, k4 = jax.random.split(key, 4)
    b1 = 1.0 / jnp.sqrt(jnp.float32(s_size))
    b2 = 1.0 / jnp.sqrt(jnp.float32(h_size))
    input_w = jax.random.uniform(k1, (h_size, s_size), jnp.float32, -b1, b1)
    input_b = jax.random.uniform(k2, (h_size,), jnp.float32, -b1, b1)
    hidden_w = jax.random.uniform(k3, (a_size, h_size), jnp.float32, -b2, b2)
    hidden_b = jax.random.uniform(k4, (a_size,), jnp.float32, -b2, b2)
    return input_w, input_b, hidden_w, hidden_b


if __name__ == "__main__":
    key = jax.random.PRNGKey(0)
    pkey, xkey, skey = jax.random.split(key, 3)
    input_w, input_b, hidden_w, hidden_b = init_torch_like_params(pkey)
    w1p, b1p, w2p = pack_params(input_w, input_b, hidden_w, hidden_b)
    x = jax.random.normal(xkey, (S_SIZE,), jnp.float32)

    # Run the fused kernel once and block on the results.
    probs, logp, act, logp_act = policy_forward(x, w1p, b1p, w2p, skey)
    jax.block_until_ready((probs, logp, act, logp_act))

    # Reference with the same bf16-rounded W1 the kernel uses (tight tolerance).
    w1_used = input_w.astype(jnp.bfloat16).astype(jnp.float32)
    h_ref = jnp.maximum(x @ w1_used.T + input_b, 0.0)
    logits_ref = h_ref @ hidden_w.T + hidden_b
    probs_ref = jax.nn.softmax(logits_ref)
    logp_ref = jax.nn.log_softmax(logits_ref)
    assert jnp.allclose(probs, probs_ref, atol=1e-4), "probs mismatch (bf16-matched ref)"
    assert jnp.allclose(logp, logp_ref, atol=1e-4), "log-probs mismatch (bf16-matched ref)"

    # Loose check against the exact f32 PyTorch-equivalent forward.
    h_f32 = jnp.maximum(x @ input_w.T + input_b, 0.0)
    logits_f32 = h_f32 @ hidden_w.T + hidden_b
    assert jnp.allclose(probs, jax.nn.softmax(logits_f32), atol=5e-2), "probs far from f32 ref"

    a = int(act)
    assert 0 <= a < A_SIZE, "sampled action out of range"
    assert jnp.allclose(logp_act, logp[a], atol=1e-6), "logp[action] mismatch"

    # Full forward-equivalent call: same key -> same action.
    act2, lp2 = simple_policy(x, (w1p, b1p, w2p), skey)
    jax.block_until_ready((act2, lp2))
    assert int(act2) == a

    print("KERNEL_OK")
</pallas_src>

<mosaic_0001>
module attributes {stable_mosaic.version = 11 : i64} {
  func.func @_policy_kernel(%arg0: memref<1x1659xf32, #tpu.memory_space<vmem>>, %arg1: memref<1x128xf32, #tpu.memory_space<vmem>>, %arg2: memref<8x1659xbf16, #tpu.memory_space<vmem>>, %arg3: memref<8x1xf32, #tpu.memory_space<vmem>>, %arg4: memref<8x128xf32, #tpu.memory_space<vmem>>, %arg5: memref<4x128xf32, #tpu.memory_space<vmem>>) attributes {dimension_semantics = [], scalar_prefetch = 0 : i64, scratch_operands = 0 : i64, tpu.core_type = #tpu.core_type<tc>} {
    %c0 = arith.constant 0 : index
    %c0_0 = arith.constant 0 : index
    %0 = vector.load %arg2[%c0, %c0_0] : memref<8x1659xbf16, #tpu.memory_space<vmem>>, vector<8x1659xbf16>
    %1 = arith.extf %0 : vector<8x1659xbf16> to vector<8x1659xf32>
    %c0_1 = arith.constant 0 : index
    %c0_2 = arith.constant 0 : index
    %2 = vector.load %arg0[%c0_1, %c0_2] : memref<1x1659xf32, #tpu.memory_space<vmem>>, vector<1x1659xf32>
    %3 = vector.broadcast %2 : vector<1x1659xf32> to vector<8x1659xf32>
    %4 = arith.mulf %3, %1 : vector<8x1659xf32>
    %cst = arith.constant dense<0.000000e+00> : vector<8xf32>
    %5 = vector.multi_reduction <add>, %4, %cst [1] : vector<8x1659xf32> to vector<8xf32>
    %6 = vector.shape_cast %5 : vector<8xf32> to vector<8x1xf32>
    %c0_3 = arith.constant 0 : index
    %c0_4 = arith.constant 0 : index
    %7 = vector.load %arg3[%c0_3, %c0_4] : memref<8x1xf32, #tpu.memory_space<vmem>>, vector<8x1xf32>
    %8 = arith.addf %6, %7 : vector<8x1xf32>
    %cst_5 = arith.constant 0.000000e+00 : f32
    %9 = vector.broadcast %cst_5 : f32 to vector<8x1xf32>
    %10 = arith.maximumf %8, %9 : vector<8x1xf32>
    %c0_6 = arith.constant 0 : index
    %c0_7 = arith.constant 0 : index
    %11 = vector.load %arg4[%c0_6, %c0_7] : memref<8x128xf32, #tpu.memory_space<vmem>>, vector<8x128xf32>
    %12 = vector.broadcast %10 : vector<8x1xf32> to vector<8x128xf32>
    %13 = arith.mulf %12, %11 : vector<8x128xf32>
    %cst_8 = arith.constant dense<0.000000e+00> : vector<128xf32>
    %14 = vector.multi_reduction <add>, %13, %cst_8 [0] : vector<8x128xf32> to vector<128xf32>
    %15 = vector.shape_cast %14 : vector<128xf32> to vector<1x128xf32>
    %cst_9 = arith.constant dense<0xFF800000> : vector<1xf32>
    %16 = vector.multi_reduction <maximumf>, %15, %cst_9 [1] : vector<1x128xf32> to vector<1xf32>
    %17 = vector.shape_cast %16 : vector<1xf32> to vector<1x1xf32>
    %18 = vector.broadcast %17 : vector<1x1xf32> to vector<1x128xf32>
    %19 = arith.subf %15, %18 : vector<1x128xf32>
    %20 = math.exp %19 : vector<1x128xf32>
    %cst_10 = arith.constant dense<0.000000e+00> : vector<1xf32>
    %21 = vector.multi_reduction <add>, %20, %cst_10 [1] : vector<1x128xf32> to vector<1xf32>
    %22 = vector.shape_cast %21 : vector<1xf32> to vector<1x1xf32>
    %23 = math.log %22 : vector<1x1xf32>
    %24 = vector.broadcast %23 : vector<1x1xf32> to vector<1x128xf32>
    %25 = arith.subf %19, %24 : vector<1x128xf32>
    %26 = math.exp %25 : vector<1x128xf32>
    %c0_11 = arith.constant 0 : index
    %c0_12 = arith.constant 0 : index
    %27 = vector.load %arg1[%c0_11, %c0_12] : memref<1x128xf32, #tpu.memory_space<vmem>>, vector<1x128xf32>
    %28 = arith.addf %25, %27 : vector<1x128xf32>
    %cst_13 = arith.constant dense<0xFF800000> : vector<1xf32>
    %29 = vector.multi_reduction <maximumf>, %28, %cst_13 [1] : vector<1x128xf32> to vector<1xf32>
    %30 = vector.shape_cast %29 : vector<1xf32> to vector<1x1xf32>
    %31 = tpu.iota {dimensions = array<i32: 1>} : vector<1x128xi32>
    %32 = vector.broadcast %30 : vector<1x1xf32> to vector<1x128xf32>
    %33 = arith.cmpf oge, %28, %32 : vector<1x128xf32>
    %c-1_i32 = arith.constant -1 : i32
    %34 = vector.broadcast %c-1_i32 : i32 to vector<1x128xi32>
    %35 = arith.select %33, %31, %34 : vector<1x128xi1>, vector<1x128xi32>
    %cst_14 = arith.constant dense<-2147483648> : vector<1xi32>
    %36 = vector.multi_reduction <maxsi>, %35, %cst_14 [1] : vector<1x128xi32> to vector<1xi32>
    %37 = vector.shape_cast %36 : vector<1xi32> to vector<1x1xi32>
    %38 = vector.broadcast %37 : vector<1x1xi32> to vector<1x128xi32>
    %39 = arith.cmpi eq, %31, %38 : vector<1x128xi32>
    %cst_15 = arith.constant 0.000000e+00 : f32
    %40 = vector.broadcast %cst_15 : f32 to vector<1x128xf32>
    %41 = arith.select %39, %25, %40 : vector<1x128xi1>, vector<1x128xf32>
    %cst_16 = arith.constant dense<0.000000e+00> : vector<1xf32>
    %42 = vector.multi_reduction <add>, %41, %cst_16 [1] : vector<1x128xf32> to vector<1xf32>
    %43 = vector.shape_cast %42 : vector<1xf32> to vector<1x1xf32>
    %c0_17 = arith.constant 0 : index
    %c0_18 = arith.constant 0 : index
    %44 = vector.load %arg5[%c0_17, %c0_18] : memref<4x128xf32, #tpu.memory_space<vmem>>, vector<1x128xf32>
    tpu.vector_store %arg5[%c0_17, %c0_18], %26 {strides = array<i32>} : memref<4x128xf32, #tpu.memory_space<vmem>>, vector<1x128xf32>,
    %c1 = arith.constant 1 : index
    %c0_19 = arith.constant 0 : index
    %45 = vector.load %arg5[%c1, %c0_19] : memref<4x128xf32, #tpu.memory_space<vmem>>, vector<1x128xf32>
    tpu.vector_store %arg5[%c1, %c0_19], %25 {strides = array<i32>} : memref<4x128xf32, #tpu.memory_space<vmem>>, vector<1x128xf32>,
    %46 = arith.sitofp %37 : vector<1x1xi32> to vector<1x1xf32>
    %47 = vector.shape_cast %46 : vector<1x1xf32> to vector<1x1xf32>
    %48 = vector.broadcast %47 : vector<1x1xf32> to vector<1x128xf32>
    %c2 = arith.constant 2 : index
    %c0_20 = arith.constant 0 : index
    %49 = vector.load %arg5[%c2, %c0_20] : memref<4x128xf32, #tpu.memory_space<vmem>>, vector<1x128xf32>
    tpu.vector_store %arg5[%c2, %c0_20], %48 {strides = array<i32>} : memref<4x128xf32, #tpu.memory_space<vmem>>, vector<1x128xf32>,
    %50 = vector.shape_cast %43 : vector<1x1xf32> to vector<1x1xf32>
    %51 = vector.broadcast %50 : vector<1x1xf32> to vector<1x128xf32>
    %c3 = arith.constant 3 : index
    %c0_21 = arith.constant 0 : index
    %52 = vector.load %arg5[%c3, %c0_21] : memref<4x128xf32, #tpu.memory_space<vmem>>, vector<1x128xf32>
    tpu.vector_store %arg5[%c3, %c0_21], %51 {strides = array<i32>} : memref<4x128xf32, #tpu.memory_space<vmem>>, vector<1x128xf32>,
    return
  }
}

</mosaic_0001>

<llo_original>
// kernel: policy_forward.1
$region0: #{policy_forward.1}
  #allocation0 [shape = 'u32[]', space=smem, size = 0x4, offset = 0x4, fixed_abs, tag = 'smem constant byte address 0x4 - core index']
  #allocation1 [shape = 'u32[144,128]{1,0:T(1,128)}', space=vmem, size = 0x12000, scoped, tag = 'internal scratch']
  %s0 = inlined_call_operand.vmem [shape: f32[1,1659], index: 0, kind: input, shape index: {}]
  %s1 = inlined_call_operand.vmem [shape: f32[1,128], index: 1, kind: input, shape index: {}]
  %s2 = inlined_call_operand.vmem [shape: bf16[8,1659], index: 2, kind: input, shape index: {}]
  %s3 = inlined_call_operand.vmem [shape: f32[8,1], index: 3, kind: input, shape index: {}]
  %s4 = inlined_call_operand.vmem [shape: f32[8,128], index: 4, kind: input, shape index: {}]
  %s5 = inlined_call_operand.vmem [shape: f32[4,128], index: 5, kind: output, shape index: {}]
  %s6 = sld [smem:[#allocation0]]
  $region30: #{policy_forward.1} parent=0
    _
  %s8 = ssub.s32 1, %s6
  %s9 = scalar_select 0, %s8, %s6
  // Predicated region
  $region2: #{policy_forward.1} parent=0 // pred_check
    _
  $region3: #{policy_forward.1} parent=0 // pred_check_branch
    %11 = sbr.rel (0) target = $region5
  $region4: #{policy_forward.1} parent=0 // pred_region
    _
  $region5: #{policy_forward.1} parent=0 // pred_fallthru
    _
  // Predicated region
  $region6: #{policy_forward.1} parent=0 // pred_check
    _
  $region7: #{policy_forward.1} parent=0 // pred_check_branch
    %13 = sbr.rel (0) target = $region9
  $region8: #{policy_forward.1} parent=0 // pred_region
    _
  $region9: #{policy_forward.1} parent=0 // pred_fallthru
    _
  // Predicated region
  $region10: #{policy_forward.1} parent=0 // pred_check
    _
  $region11: #{policy_forward.1} parent=0 // pred_check_branch
    %15 = sbr.rel (0) target = $region13
  $region12: #{policy_forward.1} parent=0 // pred_region
    _
  $region13: #{policy_forward.1} parent=0 // pred_fallthru
    _
  // Predicated region
  $region14: #{policy_forward.1} parent=0 // pred_check
    _
  $region15: #{policy_forward.1} parent=0 // pred_check_branch
    %17 = sbr.rel (0) target = $region17
  $region16: #{policy_forward.1} parent=0 // pred_region
    _
  $region17: #{policy_forward.1} parent=0 // pred_fallthru
    _
  // Predicated region
  $region18: #{policy_forward.1} parent=0 // pred_check
    _
  $region19: #{policy_forward.1} parent=0 // pred_check_branch
    %19 = sbr.rel (0) target = $region21
  $region20: #{policy_forward.1} parent=0 // pred_region
    _
  $region21: #{policy_forward.1} parent=0 // pred_fallthru
    _
  %v20 = vld [vmem:[%s2] sm:$0xff]
  %v21 = vld [vmem:[%s2 + $0x8] sm:$0xff]
  %v22 = vld [vmem:[%s2 + $0x10] sm:$0xff]
  %v23 = vld [vmem:[%s2 + $0x18] sm:$0xff]
  %v24 = vld [vmem:[%s2 + $0x20] sm:$0xff]
  %v25 = vld [vmem:[%s2 + $0x28] sm:$0xff]
  %v26 = vld [vmem:[%s2 + $0x30] sm:$0xf]
  %v27 = vunpack.c.l.bf16 %v20
  %v28 = vunpack.c.h.bf16 %v20
  %v29 = vunpack.c.l.bf16 %v21
  %v30 = vunpack.c.h.bf16 %v21
  %v31 = vunpack.c.l.bf16 %v22
  %v32 = vunpack.c.h.bf16 %v22
  %v33 = vunpack.c.l.bf16 %v23
  %v34 = vunpack.c.h.bf16 %v23
  %v35 = vunpack.c.l.bf16 %v24
  %v36 = vunpack.c.h.bf16 %v24
  %v37 = vunpack.c.l.bf16 %v25
  %v38 = vunpack.c.h.bf16 %v25
  %v39 = vunpack.c.l.bf16 %v26
  %v40 = vld [vmem:[%s0] sm:$0xff]
  %v41 = vld [vmem:[%s0 + $0x8] sm:$0x1f]
  %v44 = vlaneseq
  %v45 = vshrl.u32 %v44, 7
  %v46 = vsub.s32 0, %v45
  %v47 = vrot.slane %v40, %v46
  %v48 = vlaneseq
  %v49 = vshrl.u32 %v48, 7
  %v50 = vsub.s32 1, %v49
  %v51 = vrot.slane %v40, %v50
  %v52 = vlaneseq
  %v53 = vshrl.u32 %v52, 7
  %v54 = vsub.s32 2, %v53
  %v55 = vrot.slane %v40, %v54
  %v56 = vlaneseq
  %v57 = vshrl.u32 %v56, 7
  %v58 = vsub.s32 3, %v57
  %v59 = vrot.slane %v40, %v58
  %v60 = vlaneseq
  %v61 = vshrl.u32 %v60, 7
  %v62 = vsub.s32 4, %v61
  %v63 = vrot.slane %v40, %v62
  %v64 = vlaneseq
  %v65 = vshrl.u32 %v64, 7
  %v66 = vsub.s32 5, %v65
  %v67 = vrot.slane %v40, %v66
  %v68 = vlaneseq
  %v69 = vshrl.u32 %v68, 7
  %v70 = vsub.s32 6, %v69
  %v71 = vrot.slane %v40, %v70
  %v72 = vlaneseq
  %v73 = vshrl.u32 %v72, 7
  %v74 = vsub.s32 7, %v73
  %v75 = vrot.slane %v40, %v74
  %v76 = vlaneseq
  %v77 = vshrl.u32 %v76, 7
  %v78 = vsub.s32 0, %v77
  %v79 = vrot.slane %v41, %v78
  %v80 = vlaneseq
  %v81 = vshrl.u32 %v80, 7
  %v82 = vsub.s32 1, %v81
  %v83 = vrot.slane %v41, %v82
  %v84 = vlaneseq
  %v85 = vshrl.u32 %v84, 7
  %v86 = vsub.s32 2, %v85
  %v87 = vrot.slane %v41, %v86
  %v88 = vlaneseq
  %v89 = vshrl.u32 %v88, 7
  %v90 = vsub.s32 3, %v89
  %v91 = vrot.slane %v41, %v90
  %v92 = vlaneseq
  %v93 = vshrl.u32 %v92, 7
  %v94 = vsub.s32 4, %v93
  %v95 = vrot.slane %v41, %v94
  %v109 = vmul.f32 %v47, %v27
  %v110 = vmul.f32 %v51, %v28
  %v111 = vmul.f32 %v55, %v29
  %v112 = vmul.f32 %v59, %v30
  %v113 = vmul.f32 %v63, %v31
  %v114 = vmul.f32 %v67, %v32
  %v115 = vmul.f32 %v71, %v33
  %v116 = vmul.f32 %v75, %v34
  %v117 = vmul.f32 %v79, %v35
  %v118 = vmul.f32 %v83, %v36
  %v119 = vmul.f32 %v87, %v37
  %v120 = vmul.f32 %v91, %v38
  %v121 = vmul.f32 %v95, %v39
  %v122 = vadd.f32 %v109, %v110
  %v123 = vadd.f32 %v122, %v111
  %v124 = vadd.f32 %v123, %v112
  %v125 = vadd.f32 %v124, %v113
  %v126 = vadd.f32 %v125, %v114
  %v127 = vadd.f32 %v126, %v115
  %v128 = vadd.f32 %v127, %v116
  %v129 = vadd.f32 %v128, %v117
  %v130 = vadd.f32 %v129, %v118
  %v131 = vadd.f32 %v130, %v119
  %v132 = vadd.f32 %v131, %v120
  %vm133 = vcmask 1006592
  %v134 = vsel %vm133, %v121, 0.0
  %v135 = vadd.f32 %v132, %v134
  %136 = vadd.xlane.f32.xlu0 %v135
  %v137 = vpop.xlane.xlu0 %136
  %v138 = vld [vmem:[%s3] sm:$0xff]
  %v139 = vadd.f32 %v137, %v138
  %v140 = vmax.f32 %v139, 0.0
  %v141 = vld [vmem:[%s4] sm:$0xff]
  %143 = vset.pattern.permute.xlu0 0
  %144 = vperm.xlu0 %143, %v140
  %v145 = vpop.permute.xlu0 %144
  %v147 = vmul.f32 %v145, %v141
  %v148 = vrot.slane %v147, 4
  %v149 = vadd.f32 %v147, %v148
  %v150 = vrot.slane %v149, 2
  %v151 = vadd.f32 %v149, %v150
  %v152 = vrot.slane %v151, 1
  %v153 = vadd.f32 %v151, %v152
  %154 = vmax.xlane.f32.xlu0 %v153
  %v155 = vpop.xlane.xlu0 %154
  %v156 = vsub.f32 %v153, %v155
  %v157 = vmul.f32 %v156, 1.442695
  %v158 = vpow.pop %v157
  %159 = vadd.xlane.f32.xlu0 %v158
  %v160 = vpop.xlane.xlu0 %159
  %v161 = vlog2.pop %v160
  %v162 = vmul.f32 %v161, 0.6931472
  %v163 = vsub.f32 %v156, %v162
  %v164 = vmul.f32 %v163, 1.442695
  %v165 = vpow.pop %v164
  %v166 = vld [vmem:[%s1] sm:$0x1]
  %v167 = vadd.f32 %v163, %v166
  %vm168 = vcmask 1040384
  %v169 = vsel %vm168, %v167, -inf
  %170 = vmax.xlane.f32.xlu0 %v169
  %v171 = vpop.xlane.xlu0 %170
  %v172 = vlaneseq
  %v173 = vand.u32 %v172, 127
  %vm174 = vcmp.ge.f32.partialorder %v167, %v171
  %v175 = vsel %vm174, %v173, 4294967295
  %v176 = vsel %vm168, %v175, 2147483648
  %v177 = vand.u32 %v176, 65535
  %v178 = vshra.s32 %v176, 16
  %v179 = vcvt.s32.f32 %v177
  %v180 = vcvt.s32.f32 %v178
  %181 = vmax.xlane.f32.xlu0 %v180
  %v182 = vpop.xlane.xlu0 %181
  %vm183 = vcmp.eq.f32.partialorder %v180, %v182
  %v184 = vsel %vm183, %v179, -inf
  %185 = vmax.xlane.f32.xlu0 %v184
  %v186 = vpop.xlane.xlu0 %185
  %v187 = vcvt.f32.s32 %v186
  %v188 = vcvt.f32.s32 %v182
  %v189 = vshll.u32 %v188, 16
  %v190 = vadd.s32 %v189, %v187
  %vm191 = vcmp.eq.s32.totalorder %v173, %v190
  %v192 = vsel %vm191, %v163, 0.0
  %v193 = vsel %vm168, %v192, 0.0
  %194 = vadd.xlane.f32.xlu0 %v193
  %v195 = vpop.xlane.xlu0 %194
  %196 = vst [vmem:[%s5] sm:$0x1] %v165
  %197 = vst [vmem:[%s5 + $0x1] sm:$0x1] %v163
  %v198 = vcvt.s32.f32 %v190
  %199 = vst [vmem:[%s5 + $0x2] sm:$0x1] %v198
  %200 = vst [vmem:[%s5 + $0x3] sm:$0x1] %v195
  // Predicated region
  $region22: #{policy_forward.1} parent=0 // pred_check
    _
  $region23: #{policy_forward.1} parent=0 // pred_check_branch
    %202 = sbr.rel (0) target = $region25
  $region24: #{policy_forward.1} parent=0 // pred_region
    _
  $region25: #{policy_forward.1} parent=0 // pred_fallthru
    _
  // Predicated region
  $region26: #{policy_forward.1} parent=0 // pred_check
    _
  $region27: #{policy_forward.1} parent=0 // pred_check_branch
    %204 = sbr.rel (0) target = $region29
  $region28: #{policy_forward.1} parent=0 // pred_region
    _
  $region29: #{policy_forward.1} parent=0 // pred_fallthru
    _

</llo_original>
